<compile_context>
chip_gen: v6e
topology: v6e:2x2x1
jax: 0.10.0
libtpu: 0.0.40
codegen_flags: <defaults>
</compile_context>

<pallas_src>
import functools

import jax
import jax.numpy as jnp
from jax.experimental import pallas as pl
from jax.experimental.pallas import tpu as pltpu

_LANE = 128


def _planar_flow_kernel(n_flows, xT_ref, wT_ref, uhatT_ref, b_ref, wdotu_ref,
                        yT_ref, ld_ref):
    """One batch tile (batch on lanes) through all composed planar flows.

    xT_ref    : (D, TB)        VMEM  input tile, batch on the lane axis
    wT_ref    : (D, n_flows)   VMEM  flow weight vectors as columns (resident)
    uhatT_ref : (D, n_flows)   VMEM  corrected u vectors as columns (resident)
    b_ref     : (n_flows,)     SMEM  scalar biases
    wdotu_ref : (n_flows,)     SMEM  precomputed w_k . u_hat_k
    yT_ref    : (D, TB)        VMEM  output tile (transposed, aliases xT in HBM)
    ld_ref    : (1, TB)        VMEM  per-sample log|det J| (lane-dense row)
    """
    x = xT_ref[...].astype(jnp.float32)                        # (D, TB)
    ld = jnp.zeros((1, x.shape[1]), jnp.float32)               # (1, TB)
    for k in range(n_flows):                                   # static, fully unrolled
        w_col = wT_ref[:, k:k + 1].astype(jnp.float32)         # (D, 1)
        u_col = uhatT_ref[:, k:k + 1].astype(jnp.float32)      # (D, 1)
        b = b_ref[k]                                           # SMEM scalar
        wdot = wdotu_ref[k]                                    # SMEM scalar
        # VPU multiply + 8-sublane reduce (lane-dense) -> (1, TB)
        pre = jnp.sum(x * w_col, axis=0, keepdims=True) + b
        act = jnp.tanh(pre)                                    # EUP, (1, TB)
        x = x + u_col * act                                    # planar update, (D, TB)
        # w.u_hat >= -1 by Pyro's u_hat correction, so the log argument is >= 0
        # and log1p matches log|1 + ...| exactly.
        ld = ld + jnp.log1p((1.0 - act * act) * wdot)          # (1, TB)
    yT_ref[...] = x.astype(yT_ref.dtype)
    ld_ref[...] = ld


def pyro_planar_flow_forward(x, w, u, bias, *, block_b=1024):
    """Wrapper: tiny u_hat scalar math + layout plumbing in JAX, hot path in Pallas."""
    B, D = x.shape
    n_flows = w.shape[0]

    # Pyro's u_hat correction (guarantees invertibility of the planar map).
    alpha = jnp.sum(u * w, axis=-1, keepdims=True)                    # (n_flows, 1)
    a_prime = -1.0 + jax.nn.softplus(alpha)
    u_hat = u + (a_prime - alpha) * w / jnp.sum(w * w, axis=-1, keepdims=True)
    wdotu = jnp.sum(w * u_hat, axis=-1)                               # (n_flows,)

    # --- tile sizing: lane-dense (multiple of 128), padded batch, >=2 steps when possible.
    block_b = max(_LANE, (min(block_b, max(B, _LANE)) // _LANE) * _LANE)
    Bp = pl.cdiv(B, block_b) * block_b
    if Bp // block_b < 2 and Bp >= 2 * _LANE:
        block_b = (Bp // 2 // _LANE) * _LANE        # keep both v7x TensorCores busy
        Bp = pl.cdiv(B, block_b) * block_b
    grid_b = Bp // block_b

    # Batch on lanes: (D, Bp); zero-pad the batch tail (padded lanes sliced off below).
    xT = jnp.pad(x, ((0, Bp - B), (0, 0))).T                          # (D, Bp)
    wT = w.T                                                           # (D, n_flows)
    uhatT = u_hat.T                                                    # (D, n_flows)

    cost = pl.CostEstimate(
        flops=4 * B * D * n_flows,
        transcendentals=2 * B * n_flows,
        bytes_accessed=8 * B * D + 4 * B,
    )

    kernel = functools.partial(_planar_flow_kernel, n_flows)
    yT, ld_row = pl.pallas_call(
        kernel,
        out_shape=(
            jax.ShapeDtypeStruct((D, Bp), x.dtype),
            jax.ShapeDtypeStruct((1, Bp), jnp.float32),
        ),
        grid_spec=pltpu.PrefetchScalarGridSpec(
            num_scalar_prefetch=0,
            grid=(grid_b,),
            in_specs=[
                pl.BlockSpec((D, block_b), lambda i: (0, i)),          # x^T tile
                pl.BlockSpec((D, n_flows), lambda i: (0, 0)),          # W^T (resident)
                pl.BlockSpec((D, n_flows), lambda i: (0, 0)),          # U_hat^T (resident)
                pl.BlockSpec(memory_space=pltpu.MemorySpace.SMEM),     # bias scalars
                pl.BlockSpec(memory_space=pltpu.MemorySpace.SMEM),     # w.u_hat scalars
            ],
            out_specs=[
                pl.BlockSpec((D, block_b), lambda i: (0, i)),          # y^T tile
                pl.BlockSpec((1, block_b), lambda i: (0, i)),          # logdet row
            ],
        ),
        compiler_params=pltpu.CompilerParams(dimension_semantics=("parallel",)),
        cost_estimate=cost,
        input_output_aliases={0: 0},        # y^T reuses the x^T staging buffer in place
    )(xT, wT, uhatT, bias, wdotu)

    y = yT[:, :B].T                                                    # (B, D)
    ld = ld_row[0, :B]                                                 # (B,)
    return y, ld


def planar_flow_reference(x, w, u, bias):
    """Pure-JAX reference mirroring Pyro's ConditionedPlanar + ComposeTransformModule."""
    alpha = jnp.sum(u * w, axis=-1, keepdims=True)
    a_prime = -1.0 + jax.nn.softplus(alpha)
    u_hat = u + (a_prime - alpha) * w / jnp.sum(w * w, axis=-1, keepdims=True)
    ld = jnp.zeros((x.shape[0],), jnp.float32)
    for k in range(w.shape[0]):
        act = jnp.tanh(x @ w[k] + bias[k])[:, None]                   # (B, 1)
        ld = ld + jnp.log(jnp.abs(1.0 + (1.0 - act[:, 0] ** 2) * jnp.dot(w[k], u_hat[k])))
        x = x + u_hat[k][None, :] * act
    return x, ld


if __name__ == "__main__":
    D, N_FLOWS = 8, 2   # input_dim, n_flows

    key = jax.random.PRNGKey(0)
    kx, kw, ku, kb = jax.random.split(key, 4)

    # Deterministic parameter init mimicking Pyro Planar's reset_parameters:
    # uniform(-1/sqrt(D), 1/sqrt(D)) for bias, u, w of every flow.
    stdv = 1.0 / jnp.sqrt(jnp.float32(D))
    w = jax.random.uniform(kw, (N_FLOWS, D), minval=-stdv, maxval=stdv, dtype=jnp.float32)
    u = jax.random.uniform(ku, (N_FLOWS, D), minval=-stdv, maxval=stdv, dtype=jnp.float32)
    bias = jax.random.uniform(kb, (N_FLOWS,), minval=-stdv, maxval=stdv, dtype=jnp.float32)

    fwd = jax.jit(lambda xx: pyro_planar_flow_forward(xx, w, u, bias, block_b=1024))

    ok = True
    for B in (256, 37):  # lane-aligned batch and a ragged tail batch (exercises padding)
        x = jax.random.normal(jax.random.fold_in(kx, B), (B, D), dtype=jnp.float32)

        y, logdet = fwd(x)
        y = jax.block_until_ready(y)
        logdet = jax.block_until_ready(logdet)

        y_ref, ld_ref = planar_flow_reference(x, w, u, bias)
        ok &= (y.shape == (B, D)) and (logdet.shape == (B,))
        ok &= bool(jnp.allclose(y, y_ref, atol=1e-5, rtol=1e-5))
        ok &= bool(jnp.allclose(logdet, ld_ref, atol=1e-5, rtol=1e-5))

    assert ok
    print("KERNEL_OK")
</pallas_src>

<mosaic_0001>
module attributes {stable_mosaic.version = 11 : i64} {
  func.func @_planar_flow_kernel(%arg0: i32, %arg1: memref<8x128xf32, #tpu.memory_space<vmem>>, %arg2: memref<8x2xf32, #tpu.memory_space<vmem>>, %arg3: memref<8x2xf32, #tpu.memory_space<vmem>>, %arg4: memref<2xf32, #tpu.memory_space<smem>>, %arg5: memref<2xf32, #tpu.memory_space<smem>>, %arg6: memref<8x128xf32, #tpu.memory_space<vmem>>, %arg7: memref<1x128xf32, #tpu.memory_space<vmem>>) attributes {dimension_semantics = [#tpu.dimension_semantics<parallel>], iteration_bounds = array<i64: 2>, scalar_prefetch = 0 : i64, scratch_operands = 0 : i64, tpu.core_type = #tpu.core_type<tc>, window_params = [{transform_indices = @transform_0, window_bounds = array<i64: 8, 128>}, {pipeline_mode = #tpu.pipeline_mode<synchronous>, transform_indices = @transform_1, window_bounds = array<i64: 8, 2>}, {pipeline_mode = #tpu.pipeline_mode<synchronous>, transform_indices = @transform_2, window_bounds = array<i64: 8, 2>}, {transform_indices = @transform_3, window_bounds = array<i64: 2>}, {transform_indices = @transform_4, window_bounds = array<i64: 2>}, {transform_indices = @transform_5, window_bounds = array<i64: 8, 128>}, {transform_indices = @transform_6, window_bounds = array<i64: 1, 128>}]} {
    %c0 = arith.constant 0 : index
    %c0_0 = arith.constant 0 : index
    %0 = vector.load %arg1[%c0, %c0_0] : memref<8x128xf32, #tpu.memory_space<vmem>>, vector<8x128xf32>
    %cst = arith.constant 0.000000e+00 : f32
    %1 = vector.broadcast %cst : f32 to vector<1x128xf32>
    %c0_1 = arith.constant 0 : index
    %c0_2 = arith.constant 0 : index
    %2 = vector.load %arg2[%c0_1, %c0_2] : memref<8x2xf32, #tpu.memory_space<vmem>>, vector<8x1xf32>
    %c0_3 = arith.constant 0 : index
    %c0_4 = arith.constant 0 : index
    %3 = vector.load %arg3[%c0_3, %c0_4] : memref<8x2xf32, #tpu.memory_space<vmem>>, vector<8x1xf32>
    %c0_5 = arith.constant 0 : index
    %4 = memref.load %arg4[%c0_5] : memref<2xf32, #tpu.memory_space<smem>>
    %c0_6 = arith.constant 0 : index
    %5 = memref.load %arg5[%c0_6] : memref<2xf32, #tpu.memory_space<smem>>
    %6 = vector.broadcast %2 : vector<8x1xf32> to vector<8x128xf32>
    %7 = arith.mulf %0, %6 : vector<8x128xf32>
    %cst_7 = arith.constant dense<0.000000e+00> : vector<128xf32>
    %8 = vector.multi_reduction <add>, %7, %cst_7 [0] : vector<8x128xf32> to vector<128xf32>
    %9 = vector.shape_cast %8 : vector<128xf32> to vector<1x128xf32>
    %10 = vector.broadcast %4 : f32 to vector<1x128xf32>
    %11 = arith.addf %9, %10 : vector<1x128xf32>
    %12 = math.tanh %11 : vector<1x128xf32>
    %13 = vector.broadcast %3 : vector<8x1xf32> to vector<8x128xf32>
    %14 = vector.broadcast %12 : vector<1x128xf32> to vector<8x128xf32>
    %15 = arith.mulf %13, %14 : vector<8x128xf32>
    %16 = arith.addf %0, %15 : vector<8x128xf32>
    %17 = arith.mulf %12, %12 : vector<1x128xf32>
    %cst_8 = arith.constant 1.000000e+00 : f32
    %18 = vector.broadcast %cst_8 : f32 to vector<1x128xf32>
    %19 = arith.subf %18, %17 : vector<1x128xf32>
    %20 = vector.broadcast %5 : f32 to vector<1x128xf32>
    %21 = arith.mulf %19, %20 : vector<1x128xf32>
    %22 = math.log1p %21 : vector<1x128xf32>
    %23 = arith.addf %1, %22 : vector<1x128xf32>
    %c0_9 = arith.constant 0 : index
    %c1 = arith.constant 1 : index
    %24 = vector.load %arg2[%c0_9, %c1] : memref<8x2xf32, #tpu.memory_space<vmem>>, vector<8x1xf32>
    %c0_10 = arith.constant 0 : index
    %c1_11 = arith.constant 1 : index
    %25 = vector.load %arg3[%c0_10, %c1_11] : memref<8x2xf32, #tpu.memory_space<vmem>>, vector<8x1xf32>
    %c1_12 = arith.constant 1 : index
    %26 = memref.load %arg4[%c1_12] : memref<2xf32, #tpu.memory_space<smem>>
    %c1_13 = arith.constant 1 : index
    %27 = memref.load %arg5[%c1_13] : memref<2xf32, #tpu.memory_space<smem>>
    %28 = vector.broadcast %24 : vector<8x1xf32> to vector<8x128xf32>
    %29 = arith.mulf %16, %28 : vector<8x128xf32>
    %cst_14 = arith.constant dense<0.000000e+00> : vector<128xf32>
    %30 = vector.multi_reduction <add>, %29, %cst_14 [0] : vector<8x128xf32> to vector<128xf32>
    %31 = vector.shape_cast %30 : vector<128xf32> to vector<1x128xf32>
    %32 = vector.broadcast %26 : f32 to vector<1x128xf32>
    %33 = arith.addf %31, %32 : vector<1x128xf32>
    %34 = math.tanh %33 : vector<1x128xf32>
    %35 = vector.broadcast %25 : vector<8x1xf32> to vector<8x128xf32>
    %36 = vector.broadcast %34 : vector<1x128xf32> to vector<8x128xf32>
    %37 = arith.mulf %35, %36 : vector<8x128xf32>
    %38 = arith.addf %16, %37 : vector<8x128xf32>
    %39 = arith.mulf %34, %34 : vector<1x128xf32>
    %cst_15 = arith.constant 1.000000e+00 : f32
    %40 = vector.broadcast %cst_15 : f32 to vector<1x128xf32>
    %41 = arith.subf %40, %39 : vector<1x128xf32>
    %42 = vector.broadcast %27 : f32 to vector<1x128xf32>
    %43 = arith.mulf %41, %42 : vector<1x128xf32>
    %44 = math.log1p %43 : vector<1x128xf32>
    %45 = arith.addf %23, %44 : vector<1x128xf32>
    %c0_16 = arith.constant 0 : index
    %c0_17 = arith.constant 0 : index
    %46 = vector.load %arg6[%c0_16, %c0_17] : memref<8x128xf32, #tpu.memory_space<vmem>>, vector<8x128xf32>
    tpu.vector_store %arg6[%c0_16, %c0_17], %38 {strides = array<i32>} : memref<8x128xf32, #tpu.memory_space<vmem>>, vector<8x128xf32>,
    %c0_18 = arith.constant 0 : index
    %c0_19 = arith.constant 0 : index
    %47 = vector.load %arg7[%c0_18, %c0_19] : memref<1x128xf32, #tpu.memory_space<vmem>>, vector<1x128xf32>
    tpu.vector_store %arg7[%c0_18, %c0_19], %45 {strides = array<i32>} : memref<1x128xf32, #tpu.memory_space<vmem>>, vector<1x128xf32>,
    return
  }
  func.func @transform_0(%arg0: i32) -> (i32, i32) {
    %c0_i32 = arith.constant 0 : i32
    %c0_i32_0 = arith.constant 0 : i32
    return %c0_i32, %arg0 : i32, i32
  }
  func.func @transform_1(%arg0: i32) -> (i32, i32) {
    %c0_i32 = arith.constant 0 : i32
    %c0_i32_0 = arith.constant 0 : i32
    %c0_i32_1 = arith.constant 0 : i32
    return %c0_i32, %c0_i32_0 : i32, i32
  }
  func.func @transform_2(%arg0: i32) -> (i32, i32) {
    %c0_i32 = arith.constant 0 : i32
    %c0_i32_0 = arith.constant 0 : i32
    %c0_i32_1 = arith.constant 0 : i32
    return %c0_i32, %c0_i32_0 : i32, i32
  }
  func.func @transform_3(%arg0: i32) -> i32 {
    %c0_i32 = arith.constant 0 : i32
    %c0_i32_0 = arith.constant 0 : i32
    return %c0_i32 : i32
  }
  func.func @transform_4(%arg0: i32) -> i32 {
    %c0_i32 = arith.constant 0 : i32
    %c0_i32_0 = arith.constant 0 : i32
    return %c0_i32 : i32
  }
  func.func @transform_5(%arg0: i32) -> (i32, i32) {
    %c0_i32 = arith.constant 0 : i32
    %c0_i32_0 = arith.constant 0 : i32
    return %c0_i32, %arg0 : i32, i32
  }
  func.func @transform_6(%arg0: i32) -> (i32, i32) {
    %c0_i32 = arith.constant 0 : i32
    %c0_i32_0 = arith.constant 0 : i32
    return %c0_i32, %arg0 : i32, i32
  }
}

</mosaic_0001>

<llo_original>
// kernel: _lambda_.1
$region0: #{_lambda_.1}
  #allocation0 [shape = 'u32[]', space=smem, size = 0x4, offset = 0x4, fixed_abs, tag = 'smem constant byte address 0x4 - core index']
  #allocation1 [shape = 'u32[144,128]{1,0:T(1,128)}', space=vmem, size = 0x12000, scoped, tag = 'internal scratch']
  %s0 = inlined_call_operand.vmem [shape: f32[8,256], index: 0, kind: input, shape index: {}, may-alias: {0,5}]
  %s1 = inlined_call_operand.vmem [shape: f32[8,2], index: 1, kind: input, shape index: {}]
  %s2 = inlined_call_operand.vmem [shape: f32[8,2], index: 2, kind: input, shape index: {}]
  %s3 = inlined_call_operand.vmem [shape: f32[2], index: 3, kind: input, shape index: {}]
  %s4 = inlined_call_operand.vmem [shape: f32[2], index: 4, kind: input, shape index: {}]
  %s5 = inlined_call_operand.vmem [shape: f32[8,256], index: 5, kind: output, shape index: {0}, may-alias: {0,5}]
  %s6 = inlined_call_operand.hbm [shape: f32[1,256], index: 6, kind: output, shape index: {1}]
  %7 = xla_tuple %s5, %s6
  %s8 = sld [smem:[#allocation0]]
  $region69: #{_lambda_.1} parent=0
    _
  %s10 = ssub.s32 1, %s8
  %s11 = scalar_select 0, %s10, %s8
  $region1: #{_lambda_.1} parent=0
    #allocation2 [shape = 'u8[512]{0}', space=smem, size = 0x200, scoped, tag = 'input window, operand 3, single buffered']
    #allocation3 [shape = 's32[2]{0}', space=sflag, size = 0x8, scoped, tag = 'scoped memory for _lambda_.1']
    #allocation4 [shape = 's32[2]{0}', space=sflag, size = 0x8, scoped, tag = 'scoped memory for _lambda_.1']
    #allocation5 [shape = 'u8[512]{0}', space=smem, size = 0x200, scoped, tag = 'input window, operand 4, single buffered']
    #allocation6 [shape = 's32[1]{0}', space=sflag, size = 0x4, scoped, tag = 'scoped memory for _lambda_.1']
    #allocation7 [shape = 'u8[1024]{0}', space=vmem, size = 0x400, scoped, tag = 'output window, operand 1']
    %12 = vsyncpa [#allocation4], 0
    %13 = vsyncpa [#allocation6], 0
    %14 = vsyncpa [#allocation3], 0
    %s15 = scalar_lea.sflag [#allocation3], 1
    %16 = vsyncpa %s15, 0
    loop: start=0, step=1, limit=4
    $region2: #{_lambda_.1} parent=1 // loop_pre_header
      _
    $region3: #{_lambda_.1} parent=1 // loop_header
      %s18 = sphi 0, %s22
      %p19 = scmp.ge.s32.totalorder %s18, 4
      %s28 = sphi 0, %s30
      %s31 = sphi 0, %s28
      %s32 = sphi 0, %s31
      %s48 = sphi 0, %s32
      %s52 = sphi 0, %s52
      %s54 = sphi 0, %s52
      %s55 = sphi 0, %s54
      %s69 = sphi 0, %s55
      %s73 = sphi 0, %s73
      %s75 = sphi 0, %s73
      %s76 = sphi 0, %s75
      %s90 = sphi 0, %s76
      %s94 = sphi 0, %s94
      %s96 = sphi 0, %s94
      %s97 = sphi 0, %s96
      %s111 = sphi 0, %s97
      %s115 = sphi 0, %s115
      %s117 = sphi 0, %s115
      %s118 = sphi 0, %s117
      %s132 = sphi 0, %s118
      %s138 = sphi 0, %s140
      %s141 = sphi 0, %s138
      %s142 = sphi 0, %s141
      %s158 = sphi 0, %s142
      %s164 = sphi 0, %s166
      %s167 = sphi 0, %s164
      %s168 = sphi 0, %s167
      %s184 = sphi 0, %s168
    $region4: #{_lambda_.1} parent=1 // loop_header_branch
      %21 = sbr.rel (%p19) target = $region8
    $region5: #{_lambda_.1} parent=1 // loop_body
      %s23 = ssub.s32 %s18, 1
      %s24 = ssub.s32 %s18, 2
      %s25 = sadd.s32 %s18, 1
      %s26 = ssub.s32 %s18, %s25
      %p27 = scmp.eq.s32.totalorder %s26, 0
      %s29 = sadd.s32 %s28, 1
      %s30 = scalar_select %p27, %s28, %s29
      %p33 = pneg %p27
      %p34 = scmp.eq.s32.totalorder %s18, 1
      %p35 = por %p33, %p34
      %p36 = scmp.ne.s32.totalorder %s28, %s31
      %p37 = scmp.eq.s32.totalorder %s18, 0
      %p38 = por %p36, %p37
      %p39 = scmp.ne.s32.totalorder %s28, %s31
      %p40 = scmp.eq.s32.totalorder %s23, 1
      %p41 = por %p39, %p40
      %p42 = scmp.ne.s32.totalorder %s31, %s32
      %p43 = scmp.eq.s32.totalorder %s23, 0
      %p44 = por %p42, %p43
      %p45 = scmp.ne.s32.totalorder %s31, %s32
      %p46 = scmp.eq.s32.totalorder %s24, 1
      %p47 = por %p45, %p46
      %p49 = scmp.ne.s32.totalorder %s32, %s48
      %p50 = scmp.eq.s32.totalorder %s24, 0
      %p51 = por %p49, %p50
      %s53 = sadd.s32 %s52, 1
      %p56 = scmp.eq.s32.totalorder %s18, 1
      %p57 = scmp.ne.s32.totalorder %s52, %s54
      %p58 = scmp.eq.s32.totalorder %s18, 0
      %p59 = por %p57, %p58
      %p60 = scmp.ne.s32.totalorder %s52, %s54
      %p61 = scmp.eq.s32.totalorder %s23, 1
      %p62 = por %p60, %p61
      %p63 = scmp.ne.s32.totalorder %s54, %s55
      %p64 = scmp.eq.s32.totalorder %s23, 0
      %p65 = por %p63, %p64
      %p66 = scmp.ne.s32.totalorder %s54, %s55
      %p67 = scmp.eq.s32.totalorder %s24, 1
      %p68 = por %p66, %p67
      %p70 = scmp.ne.s32.totalorder %s55, %s69
      %p71 = scmp.eq.s32.totalorder %s24, 0
      %p72 = por %p70, %p71
      %s74 = sadd.s32 %s73, 1
      %p77 = scmp.eq.s32.totalorder %s18, 1
      %p78 = scmp.ne.s32.totalorder %s73, %s75
      %p79 = scmp.eq.s32.totalorder %s18, 0
      %p80 = por %p78, %p79
      %p81 = scmp.ne.s32.totalorder %s73, %s75
      %p82 = scmp.eq.s32.totalorder %s23, 1
      %p83 = por %p81, %p82
      %p84 = scmp.ne.s32.totalorder %s75, %s76
      %p85 = scmp.eq.s32.totalorder %s23, 0
      %p86 = por %p84, %p85
      %p87 = scmp.ne.s32.totalorder %s75, %s76
      %p88 = scmp.eq.s32.totalorder %s24, 1
      %p89 = por %p87, %p88
      %p91 = scmp.ne.s32.totalorder %s76, %s90
      %p92 = scmp.eq.s32.totalorder %s24, 0
      %p93 = por %p91, %p92
      %s95 = sadd.s32 %s94, 1
      %p98 = scmp.eq.s32.totalorder %s18, 1
      %p99 = scmp.ne.s32.totalorder %s94, %s96
      %p100 = scmp.eq.s32.totalorder %s18, 0
      %p101 = por %p99, %p100
      %p102 = scmp.ne.s32.totalorder %s94, %s96
      %p103 = scmp.eq.s32.totalorder %s23, 1
      %p104 = por %p102, %p103
      %p105 = scmp.ne.s32.totalorder %s96, %s97
      %p106 = scmp.eq.s32.totalorder %s23, 0
      %p107 = por %p105, %p106
      %p108 = scmp.ne.s32.totalorder %s96, %s97
      %p109 = scmp.eq.s32.totalorder %s24, 1
      %p110 = por %p108, %p109
      %p112 = scmp.ne.s32.totalorder %s97, %s111
      %p113 = scmp.eq.s32.totalorder %s24, 0
      %p114 = por %p112, %p113
      %s116 = sadd.s32 %s115, 1
      %p119 = scmp.eq.s32.totalorder %s18, 1
      %p120 = scmp.ne.s32.totalorder %s115, %s117
      %p121 = scmp.eq.s32.totalorder %s18, 0
      %p122 = por %p120, %p121
      %p123 = scmp.ne.s32.totalorder %s115, %s117
      %p124 = scmp.eq.s32.totalorder %s23, 1
      %p125 = por %p123, %p124
      %p126 = scmp.ne.s32.totalorder %s117, %s118
      %p127 = scmp.eq.s32.totalorder %s23, 0
      %p128 = por %p126, %p127
      %p129 = scmp.ne.s32.totalorder %s117, %s118
      %p130 = scmp.eq.s32.totalorder %s24, 1
      %p131 = por %p129, %p130
      %p133 = scmp.ne.s32.totalorder %s118, %s132
      %p134 = scmp.eq.s32.totalorder %s24, 0
      %p135 = por %p133, %p134
      %s136 = ssub.s32 %s18, %s25
      %p137 = scmp.eq.s32.totalorder %s136, 0
      %s139 = sadd.s32 %s138, 1
      %s140 = scalar_select %p137, %s138, %s139
      %p143 = pneg %p137
      %p144 = scmp.eq.s32.totalorder %s18, 1
      %p145 = por %p143, %p144
      %p146 = scmp.ne.s32.totalorder %s138, %s141
      %p147 = scmp.eq.s32.totalorder %s18, 0
      %p148 = por %p146, %p147
      %p149 = scmp.ne.s32.totalorder %s138, %s141
      %p150 = scmp.eq.s32.totalorder %s23, 1
      %p151 = por %p149, %p150
      %p152 = scmp.ne.s32.totalorder %s141, %s142
      %p153 = scmp.eq.s32.totalorder %s23, 0
      %p154 = por %p152, %p153
      %p155 = scmp.ne.s32.totalorder %s141, %s142
      %p156 = scmp.eq.s32.totalorder %s24, 1
      %p157 = por %p155, %p156
      %p159 = scmp.ne.s32.totalorder %s142, %s158
      %p160 = scmp.eq.s32.totalorder %s24, 0
      %p161 = por %p159, %p160
      %s162 = ssub.s32 %s18, %s25
      %p163 = scmp.eq.s32.totalorder %s162, 0
      %s165 = sadd.s32 %s164, 1
      %s166 = scalar_select %p163, %s164, %s165
      %p169 = pneg %p163
      %p170 = scmp.eq.s32.totalorder %s18, 1
      %p171 = por %p169, %p170
      %p172 = scmp.ne.s32.totalorder %s164, %s167
      %p173 = scmp.eq.s32.totalorder %s18, 0
      %p174 = por %p172, %p173
      %p175 = scmp.ne.s32.totalorder %s164, %s167
      %p176 = scmp.eq.s32.totalorder %s23, 1
      %p177 = por %p175, %p176
      %p178 = scmp.ne.s32.totalorder %s167, %s168
      %p179 = scmp.eq.s32.totalorder %s23, 0
      %p180 = por %p178, %p179
      %p181 = scmp.ne.s32.totalorder %s167, %s168
      %p182 = scmp.eq.s32.totalorder %s24, 1
      %p183 = por %p181, %p182
      %p185 = scmp.ne.s32.totalorder %s168, %s184
      %p186 = scmp.eq.s32.totalorder %s24, 0
      %p187 = por %p185, %p186
      %p188 = scmp.le.s32.totalorder 1, %s18
      %p189 = scmp.lt.s32.totalorder %s18, 3
      %p190 = pnand %p188, %p189
      %p191 = pneg %p190
      // Predicated region
      $region9: #{_lambda_.1} parent=5 // pred_check
        _
      $region10: #{_lambda_.1} parent=5 // pred_check_branch
        %193 = sbr.rel (%p190) target = $region12
      $region11: #{_lambda_.1} parent=5 // pred_region
        %s194 = ssub.s32 %s18, 1
        // Predicated region
        $region13: #{_lambda_.1} parent=11 // pred_check
          %p195 = pneg %p65
        $region14: #{_lambda_.1} parent=11 // pred_check_branch
          %197 = sbr.rel (%p195) target = $region16
        $region15: #{_lambda_.1} parent=11 // pred_region
          _
        $region16: #{_lambda_.1} parent=11 // pred_fallthru
          _
        // Predicated region
        $region17: #{_lambda_.1} parent=11 // pred_check
          %p198 = pneg %p86
        $region18: #{_lambda_.1} parent=11 // pred_check_branch
          %200 = sbr.rel (%p198) target = $region20
        $region19: #{_lambda_.1} parent=11 // pred_region
          _
        $region20: #{_lambda_.1} parent=11 // pred_fallthru
          _
        // Predicated region
        $region21: #{_lambda_.1} parent=11 // pred_check
          %p201 = pneg %p107
        $region22: #{_lambda_.1} parent=11 // pred_check_branch
          %203 = sbr.rel (%p201) target = $region24
        $region23: #{_lambda_.1} parent=11 // pred_region
          %s205 = ssub.s32 16, 16
          %206 = vsyncadd [#allocation4], %s205
          %s208 = sshll.u32 %s3, 4
          %s209 = int_to_ptr.vmem [resolvable:$true] %s208
          %211 = dma.vmem_to_smem %s209, 16, [#allocation2], [#allocation4]
        $region24: #{_lambda_.1} parent=11 // pred_fallthru
          _
        // Predicated region
        $region25: #{_lambda_.1} parent=11 // pred_check
          %p212 = pneg %p128
        $region26: #{_lambda_.1} parent=11 // pred_check_branch
          %214 = sbr.rel (%p212) target = $region28
        $region27: #{_lambda_.1} parent=11 // pred_region
          %s216 = ssub.s32 16, 16
          %217 = vsyncadd [#allocation6], %s216
          %s219 = sshll.u32 %s4, 4
          %s220 = int_to_ptr.vmem [resolvable:$true] %s219
          %222 = dma.vmem_to_smem %s220, 16, [#allocation5], [#allocation6]
        $region28: #{_lambda_.1} parent=11 // pred_fallthru
          _
      $region12: #{_lambda_.1} parent=5 // pred_fallthru
        _
      %p223 = scmp.lt.s32.totalorder %s18, 2
      // Predicated region
      $region29: #{_lambda_.1} parent=5 // pred_check
        %p224 = pneg %p223
      $region30: #{_lambda_.1} parent=5 // pred_check_branch
        %226 = sbr.rel (%p224) target = $region32
      $region31: #{_lambda_.1} parent=5 // pred_region
        // Predicated region
        $region33: #{_lambda_.1} parent=31 // pred_check
          %p227 = pneg %p38
        $region34: #{_lambda_.1} parent=31 // pred_check_branch
          %229 = sbr.rel (%p227) target = $region36
        $region35: #{_lambda_.1} parent=31 // pred_region
          %p230 = scmp.lt.s32.totalorder %s18, 1
          %s231 = scalar_select %p230, %s18, 1
          %s232 = smul.addr %s231, 8
          %s233 = scalar_lea.vmem %s0, %s232
        $region36: #{_lambda_.1} parent=31 // pred_fallthru
          _
      $region32: #{_lambda_.1} parent=5 // pred_fallthru
        _
      %p234 = scmp.le.s32.totalorder 1, %s18
      %p235 = scmp.lt.s32.totalorder %s18, 3
      %p236 = pnand %p234, %p235
      %p237 = pneg %p236
      // Predicated region
      $region37: #{_lambda_.1} parent=5 // pred_check
        _
      $region38: #{_lambda_.1} parent=5 // pred_check_branch
        %239 = sbr.rel (%p236) target = $region40
      $region39: #{_lambda_.1} parent=5 // pred_region
        %s240 = ssub.s32 %s18, 1
        // Predicated region
        $region41: #{_lambda_.1} parent=39 // pred_check
          %p241 = pneg %p107
        $region42: #{_lambda_.1} parent=39 // pred_check_branch
          %243 = sbr.rel (%p241) target = $region44
        $region43: #{_lambda_.1} parent=39 // pred_region
          %244 = dma.done [#allocation4], 16
        $region44: #{_lambda_.1} parent=39 // pred_fallthru
          _
        // Predicated region
        $region45: #{_lambda_.1} parent=39 // pred_check
          %p245 = pneg %p128
        $region46: #{_lambda_.1} parent=39 // pred_check_branch
          %247 = sbr.rel (%p245) target = $region48
        $region47: #{_lambda_.1} parent=39 // pred_region
          %248 = dma.done [#allocation6], 16
        $region48: #{_lambda_.1} parent=39 // pred_fallthru
          _
        %249 = sfence
        %p250 = scmp.lt.s32.totalorder %s23, 1
        %s251 = scalar_select %p250, %s23, 1
        %s252 = smul.addr %s251, 8
        %s253 = scalar_lea.vmem %s0, %s252
        %p254 = pneg %p44
        %p255 = pneg %p41
        %p256 = pneg %p65
        %p257 = pneg %p62
        %p258 = pneg %p86
        %p259 = pneg %p83
        %p260 = pneg %p107
        %p261 = pneg %p104
        %p262 = pneg %p128
        %p263 = pneg %p125
        %p264 = pneg %p154
        %p265 = pneg %p151
        %p266 = scmp.lt.s32.totalorder %s23, 1
        %s267 = scalar_select %p266, %s23, 1
        %s268 = smul.addr %s267, 8
        %s269 = scalar_lea.vmem %s5, %s268
        %p270 = pneg %p180
        %p271 = pneg %p177
        %s272 = sand.u32 %s167, 1
        %s273 = scalar_lea.sflag [#allocation3], %s272
        %s274 = sand.u32 %s167, 1
        %s275 = scalar_lea.vmem [#allocation7], %s274
        %p276 = scmp.lt.s32.totalorder %s23, 1
        %s277 = scalar_select %p276, %s23, 1
        %s278 = smul.addr %s277, 8
        %s279 = scalar_lea.vmem %s0, %s278
        %p280 = scmp.lt.s32.totalorder %s23, 1
        %s281 = scalar_select %p280, %s23, 1
        %s282 = smul.addr %s281, 8
        %s283 = scalar_lea.vmem %s5, %s282
        %v284 = vld [vmem:[%s279] sm:$0xff]
        %v285 = vld [vmem:[%s1] sm:$0xff]
        %v286 = vld [vmem:[%s2] sm:$0xff]
        %s287 = sld [smem:[#allocation2]]
        %s288 = sld [smem:[#allocation5]]
        %290 = vset.pattern.permute.xlu0 0
        %291 = vperm.xlu0 %290, %v285
        %v292 = vpop.permute.xlu0 %291
        %v294 = vmul.f32 %v284, %v292
        %v295 = vrot.slane %v294, 4
        %v296 = vadd.f32 %v294, %v295
        %v297 = vrot.slane %v296, 2
        %v298 = vadd.f32 %v296, %v297
        %v299 = vrot.slane %v298, 1
        %v300 = vadd.f32 %v298, %v299
        %v301 = vstv %s287
        %v302 = vadd.f32 %v300, %v301
        %v303 = vtanh.pop %v302
        %305 = vset.pattern.permute.xlu0 0
        %306 = vperm.xlu0 %305, %v286
        %v307 = vpop.permute.xlu0 %306
        %v309 = vmul.f32 %v307, %v303
        %v310 = vadd.f32 %v284, %v309
        %v311 = vmul.f32 %v303, %v303
        %v312 = vsub.f32 1.0, %v311
        %v313 = vstv %s288
        %v314 = vmul.f32 %v312, %v313
        %v315 = vadd.f32 %v314, 1.0
        %v316 = vlog2.pop %v315
        %v317 = vmul.f32 %v316, 0.6931472
        %v318 = vmul.f32 -0.5, %v314
        %v319 = vadd.f32 %v318, 1.0
        %v320 = vmul.f32 %v319, %v314
        %v321 = vand.u32 2147483647, %v314
        %vm322 = vcmp.lt.f32.partialorder %v321, 0.0004427343
        %v323 = vsel %vm322, %v320, %v317
        %v324 = vadd.f32 %v323, 0.0
        %s325 = sld [smem:[#allocation2 + $0x1]]
        %s326 = sld [smem:[#allocation5 + $0x1]]
        %327 = vset.pattern.permute.xlu0 1
        %328 = vperm.xlu0 %327, %v285
        %v329 = vpop.permute.xlu0 %328
        %v331 = vmul.f32 %v310, %v329
        %v332 = vrot.slane %v331, 4
        %v333 = vadd.f32 %v331, %v332
        %v334 = vrot.slane %v333, 2
        %v335 = vadd.f32 %v333, %v334
        %v336 = vrot.slane %v335, 1
        %v337 = vadd.f32 %v335, %v336
        %v338 = vstv %s325
        %v339 = vadd.f32 %v337, %v338
        %v340 = vtanh.pop %v339
        %341 = vset.pattern.permute.xlu0 1
        %342 = vperm.xlu0 %341, %v286
        %v343 = vpop.permute.xlu0 %342
        %v345 = vmul.f32 %v343, %v340
        %v346 = vadd.f32 %v310, %v345
        %v347 = vmul.f32 %v340, %v340
        %v348 = vsub.f32 1.0, %v347
        %v349 = vstv %s326
        %v350 = vmul.f32 %v348, %v349
        %v351 = vadd.f32 %v350, 1.0
        %v352 = vlog2.pop %v351
        %v353 = vmul.f32 %v352, 0.6931472
        %v354 = vmul.f32 -0.5, %v350
        %v355 = vadd.f32 %v354, 1.0
        %v356 = vmul.f32 %v355, %v350
        %v357 = vand.u32 2147483647, %v350
        %vm358 = vcmp.lt.f32.partialorder %v357, 0.0004427343
        %v359 = vsel %vm358, %v356, %v353
        %v360 = vadd.f32 %v324, %v359
        %361 = vst [vmem:[%s283] sm:$0xff] %v346
        %362 = vst [vmem:[%s275] sm:$0x1] %v360
        %p363 = scmp.lt.s32.totalorder %s23, 1
        %s364 = scalar_select %p363, %s23, 1
        %s365 = smul.addr %s364, 8
        %s366 = scalar_lea.vmem %s5, %s365
        %s367 = sand.u32 %s167, 1
        %s368 = scalar_lea.sflag [#allocation3], %s367
        %s369 = sand.u32 %s167, 1
        %s370 = scalar_lea.vmem [#allocation7], %s369
        // Predicated region
        $region49: #{_lambda_.1} parent=39 // pred_check
          %p371 = pneg %p151
        $region50: #{_lambda_.1} parent=39 // pred_check_branch
          %373 = sbr.rel (%p371) target = $region52
        $region51: #{_lambda_.1} parent=39 // pred_region
          _
        $region52: #{_lambda_.1} parent=39 // pred_fallthru
          _
        // Predicated region
        $region53: #{_lambda_.1} parent=39 // pred_check
          %p374 = pneg %p177
        $region54: #{_lambda_.1} parent=39 // pred_check_branch
          %376 = sbr.rel (%p374) target = $region56
        $region55: #{_lambda_.1} parent=39 // pred_region
          %s378 = ssub.s32 16, 16
          %379 = vsyncadd %s368, %s378
          %s380 = smul.addr %s23, 16
          %s381 = scalar_lea.hbm %s6, %s380
          %s383 = sshll.u32 %s370, 4
          %s384 = int_to_ptr.vmem [resolvable:$true] %s383
          %386 = dma.vmem_to_hbm [thread:$0]  %s384, 16, %s381, %s368
        $region56: #{_lambda_.1} parent=39 // pred_fallthru
          _
      $region40: #{_lambda_.1} parent=5 // pred_fallthru
        _
      %p387 = scmp.le.s32.totalorder 2, %s18
      // Predicated region
      $region57: #{_lambda_.1} parent=5 // pred_check
        %p388 = pneg %p387
      $region58: #{_lambda_.1} parent=5 // pred_check_branch
        %390 = sbr.rel (%p388) target = $region60
      $region59: #{_lambda_.1} parent=5 // pred_region
        %s391 = ssub.s32 %s18, 2
        // Predicated region
        $region61: #{_lambda_.1} parent=59 // pred_check
          %p392 = pneg %p157
        $region62: #{_lambda_.1} parent=59 // pred_check_branch
          %394 = sbr.rel (%p392) target = $region64
        $region63: #{_lambda_.1} parent=59 // pred_region
          %p395 = scmp.lt.s32.totalorder %s24, 1
          %s396 = scalar_select %p395, %s24, 1
          %s397 = smul.addr %s396, 8
          %s398 = scalar_lea.vmem %s5, %s397
        $region64: #{_lambda_.1} parent=59 // pred_fallthru
          _
        // Predicated region
        $region65: #{_lambda_.1} parent=59 // pred_check
          %p399 = pneg %p183
        $region66: #{_lambda_.1} parent=59 // pred_check_branch
          %401 = sbr.rel (%p399) target = $region68
        $region67: #{_lambda_.1} parent=59 // pred_region
          %s402 = sand.u32 %s168, 1
          %s403 = scalar_lea.sflag [#allocation3], %s402
          %s404 = sand.u32 %s168, 1
          %s405 = scalar_lea.vmem [#allocation7], %s404
          %406 = dma.done %s403, 16
        $region68: #{_lambda_.1} parent=59 // pred_fallthru
          _
      $region60: #{_lambda_.1} parent=5 // pred_fallthru
        _
    $region6: #{_lambda_.1} parent=1 // loop_footer
      %s22 = sadd.s32 1, %s18
    $region7: #{_lambda_.1} parent=1 // loop_footer_branch
      %17 = sbr.rel target = $region3
    $region8: #{_lambda_.1} parent=1 // loop_exit
      _
    %407 = vsyncpa [#allocation3], 1
    %s408 = scalar_lea.sflag [#allocation3], 1
    %409 = vsyncpa %s408, 1
    %410 = vsyncpa [#allocation4], 1
    %s411 = scalar_lea.sflag [#allocation4], 1
    %412 = vsyncpa %s411, 1
    %413 = vsyncpa [#allocation6], 1

</llo_original>
